<compile_context>
chip_gen: v7x
topology: tpu7x:2x2x1
jax: 0.10.0
libtpu: 0.0.40
codegen_flags: <defaults>
</compile_context>

<pallas_src>
import functools

import jax
import jax.numpy as jnp
import numpy as np
from jax import lax
from jax.experimental import pallas as pl
from jax.experimental.pallas import tpu as pltpu

_EPS = 1e-5
_LANE = 128
_SUB = 8          # f32 sublane count (stats partial tiles are (8, C))
_ROW_ALIGN = 16   # bf16 packs (16, 128) per vreg -> keep row tiles 16-aligned
_MAX_TM = 1024


def _round_up(x, m):
    return ((x + m - 1) // m) * m


def _vmem_limit_bytes():
    """~3/4 of physical VMEM: v5e/v6e (128 MiB) -> 96 MiB, v7x (64 MiB) -> 48 MiB."""
    cap = 64 * 1024 * 1024                       # safe fallback (v7x-sized)
    try:
        hw = int(pltpu.get_tpu_info().vmem_capacity_bytes)
        if hw > 0:
            cap = hw
    except Exception:
        pass
    return max(32 * 1024 * 1024, min(cap * 3 // 4, 96 * 1024 * 1024))


def _choose_tm(m, per_row_bytes, resident_bytes, limit):
    """Largest 16-aligned row tile keeping double-buffered tiles + resident
    weights inside ~half the VMEM limit."""
    budget = limit // 2
    avail = max(budget - resident_bytes, 0)
    tm = avail // max(1, 2 * per_row_bytes)      # x2: double-buffered row tiles
    tm = max(_ROW_ALIGN, min(_MAX_TM, (tm // _ROW_ALIGN) * _ROW_ALIGN))
    if m < tm:
        tm = max(_ROW_ALIGN, _round_up(m, _ROW_ALIGN))
    return tm


# ----------------------------------------------------------------------------
# Pallas kernels
# ----------------------------------------------------------------------------
def _conv_stats_kernel(p_ref, w_ref, y_ref, sum_ref, sq_ref):
    """One M-tile of Y = P @ W (bf16 MXU, f32 acc) + per-tile BN partial sums.

    Stats are per-tile partials (no cross-tile accumulator / pl.when init), so
    the single grid axis is safely 'parallel'."""
    y = jnp.dot(p_ref[...], w_ref[...], preferred_element_type=jnp.float32)
    y_ref[...] = y.astype(y_ref.dtype)
    s = jnp.sum(y, axis=0, keepdims=True)
    q = jnp.sum(y * y, axis=0, keepdims=True)
    sum_ref[...] = jnp.broadcast_to(s, sum_ref.shape)
    sq_ref[...] = jnp.broadcast_to(q, sq_ref.shape)


def _conv_proj_stats_kernel(p_ref, w_ref, xs_ref, ws_ref,
                            y_ref, ys_ref, sum_ref, sq_ref, ssum_ref, ssq_ref):
    """conv2 matmul + 1x1 projection matmul, each with per-tile BN partials."""
    y = jnp.dot(p_ref[...], w_ref[...], preferred_element_type=jnp.float32)
    ys = jnp.dot(xs_ref[...], ws_ref[...], preferred_element_type=jnp.float32)
    y_ref[...] = y.astype(y_ref.dtype)
    ys_ref[...] = ys.astype(ys_ref.dtype)
    sum_ref[...] = jnp.broadcast_to(jnp.sum(y, axis=0, keepdims=True), sum_ref.shape)
    sq_ref[...] = jnp.broadcast_to(jnp.sum(y * y, axis=0, keepdims=True), sq_ref.shape)
    ssum_ref[...] = jnp.broadcast_to(jnp.sum(ys, axis=0, keepdims=True), ssum_ref.shape)
    ssq_ref[...] = jnp.broadcast_to(jnp.sum(ys * ys, axis=0, keepdims=True), ssq_ref.shape)


def _bn_add_relu_identity_kernel(y_ref, sc_ref, sh_ref, res_ref, o_ref):
    """out = relu(scale*y + shift + residual); f32 math, bf16 in/out."""
    y = y_ref[...].astype(jnp.float32)
    out = y * sc_ref[...] + sh_ref[...] + res_ref[...].astype(jnp.float32)
    o_ref[...] = jnp.maximum(out, 0.0).astype(o_ref.dtype)


def _bn_add_relu_proj_kernel(y_ref, sc_ref, sh_ref, ys_ref, scs_ref, shs_ref, o_ref):
    """out = relu(bn2(y) + bn_s(ys)); f32 math, bf16 in/out."""
    y = y_ref[...].astype(jnp.float32)
    ys = ys_ref[...].astype(jnp.float32)
    out = (y * sc_ref[...] + sh_ref[...]) + (ys * scs_ref[...] + shs_ref[...])
    o_ref[...] = jnp.maximum(out, 0.0).astype(o_ref.dtype)


# ----------------------------------------------------------------------------
# pallas_call wrappers
# ----------------------------------------------------------------------------
def _row_spec(tm, cols):
    return pl.BlockSpec((tm, cols), lambda i: (i, 0))


def _full_spec(shape):
    return pl.BlockSpec(shape, lambda i: (0, 0))


def _stat_spec(n):
    # (8, C) f32 block per grid step -> satisfies the (8,128) tiling rule and
    # keeps every output block distinct so the grid axis can be 'parallel'.
    return pl.BlockSpec((_SUB, n), lambda i: (i, 0))


def _cparams(limit):
    return pltpu.CompilerParams(dimension_semantics=("parallel",),
                                vmem_limit_bytes=limit)


def _conv_stats(p, w, tm, limit):
    mp, k = p.shape
    n = w.shape[1]
    nt = mp // tm
    cost = pl.CostEstimate(
        flops=2 * mp * k * n + 4 * mp * n, transcendentals=0,
        bytes_accessed=(mp * k + k * n + mp * n) * 2 + 2 * _SUB * nt * n * 4)
    return pl.pallas_call(
        _conv_stats_kernel,
        out_shape=(jax.ShapeDtypeStruct((mp, n), jnp.bfloat16),
                   jax.ShapeDtypeStruct((_SUB * nt, n), jnp.float32),
                   jax.ShapeDtypeStruct((_SUB * nt, n), jnp.float32)),
        grid=(nt,),
        in_specs=[_row_spec(tm, k), _full_spec((k, n))],
        out_specs=(_row_spec(tm, n), _stat_spec(n), _stat_spec(n)),
        compiler_params=_cparams(limit),
        cost_estimate=cost,
    )(p, w)


def _conv_proj_stats(p, w, xs, ws, tm, limit):
    mp, k = p.shape
    n = w.shape[1]
    ks = ws.shape[0]
    nt = mp // tm
    cost = pl.CostEstimate(
        flops=2 * mp * (k + ks) * n + 8 * mp * n, transcendentals=0,
        bytes_accessed=(mp * k + mp * ks + k * n + ks * n + 2 * mp * n) * 2
        + 4 * _SUB * nt * n * 4)
    return pl.pallas_call(
        _conv_proj_stats_kernel,
        out_shape=(jax.ShapeDtypeStruct((mp, n), jnp.bfloat16),
                   jax.ShapeDtypeStruct((mp, n), jnp.bfloat16),
                   jax.ShapeDtypeStruct((_SUB * nt, n), jnp.float32),
                   jax.ShapeDtypeStruct((_SUB * nt, n), jnp.float32),
                   jax.ShapeDtypeStruct((_SUB * nt, n), jnp.float32),
                   jax.ShapeDtypeStruct((_SUB * nt, n), jnp.float32)),
        grid=(nt,),
        in_specs=[_row_spec(tm, k), _full_spec((k, n)),
                  _row_spec(tm, ks), _full_spec((ks, n))],
        out_specs=(_row_spec(tm, n), _row_spec(tm, n),
                   _stat_spec(n), _stat_spec(n), _stat_spec(n), _stat_spec(n)),
        compiler_params=_cparams(limit),
        cost_estimate=cost,
    )(p, w, xs, ws)


def _bn_add_relu_identity(y, scale, shift, res, tm, limit):
    # TODO(synk): if profiling shows exposed DMA on these short bodies, add
    # pipeline_mode=pl.Buffered(3) to the row-tiled specs.
    mp, n = y.shape
    return pl.pallas_call(
        _bn_add_relu_identity_kernel,
        out_shape=jax.ShapeDtypeStruct((mp, n), jnp.bfloat16),
        grid=(mp // tm,),
        in_specs=[_row_spec(tm, n), _full_spec((1, n)), _full_spec((1, n)),
                  _row_spec(tm, n)],
        out_specs=_row_spec(tm, n),
        compiler_params=_cparams(limit),
    )(y, scale, shift, res)


def _bn_add_relu_proj(y, scale, shift, ys, scale_s, shift_s, tm, limit):
    mp, n = y.shape
    return pl.pallas_call(
        _bn_add_relu_proj_kernel,
        out_shape=jax.ShapeDtypeStruct((mp, n), jnp.bfloat16),
        grid=(mp // tm,),
        in_specs=[_row_spec(tm, n), _full_spec((1, n)), _full_spec((1, n)),
                  _row_spec(tm, n), _full_spec((1, n)), _full_spec((1, n))],
        out_specs=_row_spec(tm, n),
        compiler_params=_cparams(limit),
    )(y, scale, shift, ys, scale_s, shift_s)


# ----------------------------------------------------------------------------
# JAX glue: padding, im2col, weight reshape, BN fold
# ----------------------------------------------------------------------------
def _pad_axis(a, axis, target):
    pad = target - a.shape[axis]
    if pad <= 0:
        return a
    widths = [(0, 0)] * a.ndim
    widths[axis] = (0, pad)
    return jnp.pad(a, widths)


def _im2col3x3(x_nhwc, stride, k_pad):
    """(N,H,W,C) -> (N*Ho*Wo, k_pad) patches for a 3x3 conv with padding=1.

    Compact K packing: the 9*C true columns are padded once to k_pad (multiple
    of 128), not per-tap."""
    n, h, w, c = x_nhwc.shape
    xp = jnp.pad(x_nhwc, ((0, 0), (1, 1), (1, 1), (0, 0)))
    ho = (h + 2 - 3) // stride + 1
    wo = (w + 2 - 3) // stride + 1
    taps = []
    for kh in range(3):
        for kw in range(3):
            taps.append(xp[:,
                           kh:kh + stride * (ho - 1) + 1:stride,
                           kw:kw + stride * (wo - 1) + 1:stride,
                           :])
    p = jnp.stack(taps, axis=3)                  # (N, Ho, Wo, 9, C)
    p = p.reshape(n * ho * wo, 9 * c)
    return _pad_axis(p, 1, k_pad), ho, wo


def _weight_mat3x3(w_oihw, k_pad, cout_pad):
    """(Cout,Cin,3,3) -> bf16 (k_pad, Cout_pad), rows ordered (kh,kw,cin)."""
    cout, cin, kh, kw = w_oihw.shape
    wm = jnp.transpose(w_oihw, (2, 3, 1, 0)).reshape(kh * kw * cin, cout)
    wm = jnp.pad(wm, ((0, k_pad - kh * kw * cin), (0, cout_pad - cout)))
    return wm.astype(jnp.bfloat16)


def _weight_mat1x1(w_oihw, cin_pad, cout_pad):
    """(Cout,Cin,1,1) -> bf16 (cin_pad, Cout_pad)."""
    cout, cin = w_oihw.shape[:2]
    wm = w_oihw.reshape(cout, cin).T
    wm = jnp.pad(wm, ((0, cin_pad - cin), (0, cout_pad - cout)))
    return wm.astype(jnp.bfloat16)


def _reduce_partials(part):
    """(8*ntiles, C) per-tile partials (each 8-row group replicated) -> (1, C)."""
    return part[0::_SUB].sum(axis=0, keepdims=True)


def _fold_bn(s_sum, s_sq, m_true, gamma_p, beta_p):
    """Fold batch stats into per-channel scale/shift: bn(y) = scale*y + shift."""
    mean = s_sum / m_true
    var = jnp.maximum(s_sq / m_true - mean * mean, 0.0)
    scale = gamma_p * lax.rsqrt(var + _EPS)
    shift = beta_p - mean * scale
    return scale, shift


def _pad_vec(v, target):
    return _pad_axis(v.reshape(1, -1).astype(jnp.float32), 1, target)


# ----------------------------------------------------------------------------
# BasicBlock forward
# ----------------------------------------------------------------------------
def basic_block_forward(x_nchw, params, stride, tm=None):
    """Pallas implementation of BasicBlock.forward (tensor-input branch).

    Returns NCHW bf16 (activations kept bf16 between blocks).

    # TODO(synk): the `type(input) == dict` / `faulting` branch in the PyTorch
    # module is host-side Python control flow; only the tensor path is lowered.
    """
    in_planes = x_nchw.shape[1]
    planes = params["w1"].shape[0]
    projection = (stride != 1) or (in_planes != planes)

    n = x_nchw.shape[0]
    cout_p = _round_up(planes, _LANE)
    cin_pad = _round_up(in_planes, _LANE)            # K of the 1x1 projection
    k1 = _round_up(9 * in_planes, _LANE)             # compact im2col K, conv1
    k2 = _round_up(9 * planes, _LANE)                # compact im2col K, conv2

    # NHWC bf16 once at the boundary.
    # TODO(synk): keep NHWC/bf16 end-to-end across stacked blocks to avoid the
    # per-block boundary transposes; kept here to preserve the NCHW interface.
    x_bf = jnp.transpose(x_nchw, (0, 2, 3, 1)).astype(jnp.bfloat16)

    # --- conv1 LHS (host-side im2col, compact K) ------------------------------
    p1, ho, wo = _im2col3x3(x_bf, stride, k1)
    m = n * ho * wo

    limit = _vmem_limit_bytes()
    if tm is None:
        # Size the row tile from the most VMEM-hungry kernel (conv2 + optional
        # projection: row tiles of p2/xs/y2/ys plus resident weight mats).
        per_row = 2 * (k2 + cout_p) + (2 * (cin_pad + cout_p) if projection else 0)
        per_row = max(per_row, 2 * (k1 + cout_p), 6 * cout_p)
        resident = 4 * k2 * cout_p + (4 * cin_pad * cout_p if projection else 0)
        resident = max(resident, 4 * k1 * cout_p)
        tm = _choose_tm(m, per_row, resident, limit)
    else:
        tm = max(_ROW_ALIGN,
                 (min(tm, _round_up(m, _ROW_ALIGN)) // _ROW_ALIGN) * _ROW_ALIGN)
    mp = _round_up(m, tm)

    p1 = _pad_axis(p1, 0, mp)
    w1m = _weight_mat3x3(params["w1"], k1, cout_p)
    g1, b1 = _pad_vec(params["g1"], cout_p), _pad_vec(params["b1"], cout_p)

    # --- conv1 (+BN1 partial stats) -------------------------------------------
    y1, s1p, q1p = _conv_stats(p1, w1m, tm, limit)
    sc1, sh1 = _fold_bn(_reduce_partials(s1p), _reduce_partials(q1p), m, g1, b1)

    # BN1 + ReLU fused (by XLA under jit) into the pass that builds conv2's
    # im2col LHS -> no standalone BN-apply round trip over y1.
    out1 = jnp.maximum(y1[:m, :planes].astype(jnp.float32)
                       * sc1[:, :planes] + sh1[:, :planes], 0.0)
    out1 = out1.astype(jnp.bfloat16).reshape(n, ho, wo, planes)

    # --- conv2 (+BN2 stats) [+ 1x1 projection shortcut] ------------------------
    p2, _, _ = _im2col3x3(out1, 1, k2)
    p2 = _pad_axis(p2, 0, mp)
    w2m = _weight_mat3x3(params["w2"], k2, cout_p)
    g2, b2 = _pad_vec(params["g2"], cout_p), _pad_vec(params["b2"], cout_p)

    if projection:
        xs = x_bf[:, ::stride, ::stride, :].reshape(m, in_planes)
        xs = _pad_axis(_pad_axis(xs, 1, cin_pad), 0, mp)
        wsm = _weight_mat1x1(params["ws"], cin_pad, cout_p)
        gs, bs = _pad_vec(params["gs"], cout_p), _pad_vec(params["bs"], cout_p)

        y2, ys, s2p, q2p, ssp, qsp = _conv_proj_stats(p2, w2m, xs, wsm, tm, limit)
        sc2, sh2 = _fold_bn(_reduce_partials(s2p), _reduce_partials(q2p), m, g2, b2)
        scs, shs = _fold_bn(_reduce_partials(ssp), _reduce_partials(qsp), m, gs, bs)
        out = _bn_add_relu_proj(y2, sc2, sh2, ys, scs, shs, tm, limit)
    else:
        y2, s2p, q2p = _conv_stats(p2, w2m, tm, limit)
        sc2, sh2 = _fold_bn(_reduce_partials(s2p), _reduce_partials(q2p), m, g2, b2)
        res = _pad_axis(_pad_axis(x_bf.reshape(m, in_planes), 1, cout_p), 0, mp)
        out = _bn_add_relu_identity(y2, sc2, sh2, res, tm, limit)

    out_nhwc = out[:m, :planes].reshape(n, ho, wo, planes)
    return jnp.transpose(out_nhwc, (0, 3, 1, 2))


# ----------------------------------------------------------------------------
# Deterministic parameter init (shapes from BasicBlock.__init__)
# ----------------------------------------------------------------------------
def init_basic_block_params(key, in_planes, planes, stride):
    ks = jax.random.split(key, 9)
    params = {
        "w1": 0.1 * jax.random.normal(ks[0], (planes, in_planes, 3, 3), jnp.float32),
        "g1": 1.0 + 0.1 * jax.random.normal(ks[1], (planes,), jnp.float32),
        "b1": 0.1 * jax.random.normal(ks[2], (planes,), jnp.float32),
        "w2": 0.1 * jax.random.normal(ks[3], (planes, planes, 3, 3), jnp.float32),
        "g2": 1.0 + 0.1 * jax.random.normal(ks[4], (planes,), jnp.float32),
        "b2": 0.1 * jax.random.normal(ks[5], (planes,), jnp.float32),
    }
    if stride != 1 or in_planes != planes:
        params["ws"] = 0.1 * jax.random.normal(ks[6], (planes, in_planes, 1, 1), jnp.float32)
        params["gs"] = 1.0 + 0.1 * jax.random.normal(ks[7], (planes,), jnp.float32)
        params["bs"] = 0.1 * jax.random.normal(ks[8], (planes,), jnp.float32)
    return params


# ----------------------------------------------------------------------------
# Pure-JAX reference (for correctness check)
# ----------------------------------------------------------------------------
def _ref_bn(y_nchw, gamma, beta):
    mean = jnp.mean(y_nchw, axis=(0, 2, 3), keepdims=True)
    var = jnp.mean(jnp.square(y_nchw - mean), axis=(0, 2, 3), keepdims=True)
    return ((y_nchw - mean) * lax.rsqrt(var + _EPS)
            * gamma.reshape(1, -1, 1, 1) + beta.reshape(1, -1, 1, 1))


def ref_basic_block_forward(x, params, stride):
    conv = functools.partial(
        lax.conv_general_dilated,
        dimension_numbers=("NCHW", "OIHW", "NCHW"))
    in_planes = x.shape[1]
    planes = params["w1"].shape[0]
    projection = (stride != 1) or (in_planes != planes)

    out = conv(x, params["w1"], (stride, stride), ((1, 1), (1, 1)))
    out = jnp.maximum(_ref_bn(out, params["g1"], params["b1"]), 0.0)
    out = conv(out, params["w2"], (1, 1), ((1, 1), (1, 1)))
    out = _ref_bn(out, params["g2"], params["b2"])
    if projection:
        sc = conv(x, params["ws"], (stride, stride), ((0, 0), (0, 0)))
        sc = _ref_bn(sc, params["gs"], params["bs"])
    else:
        sc = x
    return jnp.maximum(out + sc, 0.0)


# ----------------------------------------------------------------------------
if __name__ == "__main__":
    key = jax.random.PRNGKey(0)

    # Two configs: identity shortcut, and strided projection shortcut.
    # tm=64 forces a multi-tile grid at these toy sizes so the per-tile
    # BatchNorm partial-statistics path is actually exercised.
    configs = [
        dict(in_planes=8, planes=8, stride=1, n=2, hw=16, tm=64),   # identity
        dict(in_planes=4, planes=8, stride=2, n=2, hw=16, tm=64),   # projection
    ]

    for cfg in configs:
        key, kx, kp = jax.random.split(key, 3)
        x = jax.random.normal(
            kx, (cfg["n"], cfg["in_planes"], cfg["hw"], cfg["hw"]), jnp.float32)
        params = init_basic_block_params(
            kp, cfg["in_planes"], cfg["planes"], cfg["stride"])

        fwd = jax.jit(functools.partial(
            basic_block_forward, stride=cfg["stride"], tm=cfg["tm"]))
        out = jax.block_until_ready(fwd(x, params))

        ref = jax.block_until_ready(ref_basic_block_forward(x, params, cfg["stride"]))
        assert out.shape == ref.shape, (out.shape, ref.shape)
        np.testing.assert_allclose(np.asarray(out.astype(jnp.float32)),
                                   np.asarray(ref), rtol=3e-2, atol=3e-2)

    print("KERNEL_OK")
</pallas_src>

<mosaic_0001>
module attributes {stable_mosaic.version = 11 : i64} {
  func.func @_conv_stats_kernel(%arg0: i32, %arg1: memref<64x128xbf16, #tpu.memory_space<vmem>>, %arg2: memref<128x128xbf16, #tpu.memory_space<vmem>>, %arg3: memref<64x128xbf16, #tpu.memory_space<vmem>>, %arg4: memref<8x128xf32, #tpu.memory_space<vmem>>, %arg5: memref<8x128xf32, #tpu.memory_space<vmem>>) attributes {dimension_semantics = [#tpu.dimension_semantics<parallel>], iteration_bounds = array<i64: 8>, scalar_prefetch = 0 : i64, scratch_operands = 0 : i64, tpu.core_type = #tpu.core_type<tc>, window_params = [{transform_indices = @transform_0, window_bounds = array<i64: 64, 128>}, {pipeline_mode = #tpu.pipeline_mode<synchronous>, transform_indices = @transform_1, window_bounds = array<i64: 128, 128>}, {transform_indices = @transform_2, window_bounds = array<i64: 64, 128>}, {transform_indices = @transform_3, window_bounds = array<i64: 8, 128>}, {transform_indices = @transform_4, window_bounds = array<i64: 8, 128>}]} {
    %c0 = arith.constant 0 : index
    %c0_0 = arith.constant 0 : index
    %0 = vector.load %arg1[%c0, %c0_0] : memref<64x128xbf16, #tpu.memory_space<vmem>>, vector<64x128xbf16>
    %c0_1 = arith.constant 0 : index
    %c0_2 = arith.constant 0 : index
    %1 = vector.load %arg2[%c0_1, %c0_2] : memref<128x128xbf16, #tpu.memory_space<vmem>>, vector<128x128xbf16>
    %cst = arith.constant dense<0.000000e+00> : vector<64x128xf32>
    %2 = tpu.matmul %0, %1, %cst {dimension_numbers = #tpu.dot_dimension_numbers<[1], [0], [0], [1], [0, 0, 1, 1], [], []>} : vector<64x128xbf16>, vector<128x128xbf16>, vector<64x128xf32> -> vector<64x128xf32>
    %3 = arith.truncf %2 : vector<64x128xf32> to vector<64x128xbf16>
    %c0_3 = arith.constant 0 : index
    %c0_4 = arith.constant 0 : index
    %4 = vector.load %arg3[%c0_3, %c0_4] : memref<64x128xbf16, #tpu.memory_space<vmem>>, vector<64x128xbf16>
    tpu.vector_store %arg3[%c0_3, %c0_4], %3 {strides = array<i32>} : memref<64x128xbf16, #tpu.memory_space<vmem>>, vector<64x128xbf16>,
    %cst_5 = arith.constant dense<0.000000e+00> : vector<128xf32>
    %5 = vector.multi_reduction <add>, %2, %cst_5 [0] : vector<64x128xf32> to vector<128xf32>
    %6 = vector.shape_cast %5 : vector<128xf32> to vector<1x128xf32>
    %7 = arith.mulf %2, %2 : vector<64x128xf32>
    %cst_6 = arith.constant dense<0.000000e+00> : vector<128xf32>
    %8 = vector.multi_reduction <add>, %7, %cst_6 [0] : vector<64x128xf32> to vector<128xf32>
    %9 = vector.shape_cast %8 : vector<128xf32> to vector<1x128xf32>
    %10 = vector.shape_cast %6 : vector<1x128xf32> to vector<1x128xf32>
    %11 = vector.broadcast %10 : vector<1x128xf32> to vector<8x128xf32>
    %c0_7 = arith.constant 0 : index
    %c0_8 = arith.constant 0 : index
    %12 = vector.load %arg4[%c0_7, %c0_8] : memref<8x128xf32, #tpu.memory_space<vmem>>, vector<8x128xf32>
    tpu.vector_store %arg4[%c0_7, %c0_8], %11 {strides = array<i32>} : memref<8x128xf32, #tpu.memory_space<vmem>>, vector<8x128xf32>,
    %13 = vector.shape_cast %9 : vector<1x128xf32> to vector<1x128xf32>
    %14 = vector.broadcast %13 : vector<1x128xf32> to vector<8x128xf32>
    %c0_9 = arith.constant 0 : index
    %c0_10 = arith.constant 0 : index
    %15 = vector.load %arg5[%c0_9, %c0_10] : memref<8x128xf32, #tpu.memory_space<vmem>>, vector<8x128xf32>
    tpu.vector_store %arg5[%c0_9, %c0_10], %14 {strides = array<i32>} : memref<8x128xf32, #tpu.memory_space<vmem>>, vector<8x128xf32>,
    return
  }
  func.func @transform_0(%arg0: i32) -> (i32, i32) {
    %c0_i32 = arith.constant 0 : i32
    %c0_i32_0 = arith.constant 0 : i32
    return %arg0, %c0_i32 : i32, i32
  }
  func.func @transform_1(%arg0: i32) -> (i32, i32) {
    %c0_i32 = arith.constant 0 : i32
    %c0_i32_0 = arith.constant 0 : i32
    %c0_i32_1 = arith.constant 0 : i32
    return %c0_i32, %c0_i32_0 : i32, i32
  }
  func.func @transform_2(%arg0: i32) -> (i32, i32) {
    %c0_i32 = arith.constant 0 : i32
    %c0_i32_0 = arith.constant 0 : i32
    return %arg0, %c0_i32 : i32, i32
  }
  func.func @transform_3(%arg0: i32) -> (i32, i32) {
    %c0_i32 = arith.constant 0 : i32
    %c0_i32_0 = arith.constant 0 : i32
    return %arg0, %c0_i32 : i32, i32
  }
  func.func @transform_4(%arg0: i32) -> (i32, i32) {
    %c0_i32 = arith.constant 0 : i32
    %c0_i32_0 = arith.constant 0 : i32
    return %arg0, %c0_i32 : i32, i32
  }
}

module attributes {stable_mosaic.version = 11 : i64} {
  func.func @_bn_add_relu_identity_kernel(%arg0: i32, %arg1: memref<64x128xbf16, #tpu.memory_space<vmem>>, %arg2: memref<1x128xf32, #tpu.memory_space<vmem>>, %arg3: memref<1x128xf32, #tpu.memory_space<vmem>>, %arg4: memref<64x128xbf16, #tpu.memory_space<vmem>>, %arg5: memref<64x128xbf16, #tpu.memory_space<vmem>>) attributes {dimension_semantics = [#tpu.dimension_semantics<parallel>], iteration_bounds = array<i64: 8>, scalar_prefetch = 0 : i64, scratch_operands = 0 : i64, tpu.core_type = #tpu.core_type<tc>, window_params = [{transform_indices = @transform_0, window_bounds = array<i64: 64, 128>}, {pipeline_mode = #tpu.pipeline_mode<synchronous>, transform_indices = @transform_1, window_bounds = array<i64: 1, 128>}, {pipeline_mode = #tpu.pipeline_mode<synchronous>, transform_indices = @transform_2, window_bounds = array<i64: 1, 128>}, {transform_indices = @transform_3, window_bounds = array<i64: 64, 128>}, {transform_indices = @transform_4, window_bounds = array<i64: 64, 128>}]} {
    %c0 = arith.constant 0 : index
    %c0_0 = arith.constant 0 : index
    %0 = vector.load %arg1[%c0, %c0_0] : memref<64x128xbf16, #tpu.memory_space<vmem>>, vector<64x128xbf16>
    %1 = arith.extf %0 : vector<64x128xbf16> to vector<64x128xf32>
    %c0_1 = arith.constant 0 : index
    %c0_2 = arith.constant 0 : index
    %2 = vector.load %arg2[%c0_1, %c0_2] : memref<1x128xf32, #tpu.memory_space<vmem>>, vector<1x128xf32>
    %3 = vector.broadcast %2 : vector<1x128xf32> to vector<64x128xf32>
    %4 = arith.mulf %1, %3 : vector<64x128xf32>
    %c0_3 = arith.constant 0 : index
    %c0_4 = arith.constant 0 : index
    %5 = vector.load %arg3[%c0_3, %c0_4] : memref<1x128xf32, #tpu.memory_space<vmem>>, vector<1x128xf32>
    %6 = vector.broadcast %5 : vector<1x128xf32> to vector<64x128xf32>
    %7 = arith.addf %4, %6 : vector<64x128xf32>
    %c0_5 = arith.constant 0 : index
    %c0_6 = arith.constant 0 : index
    %8 = vector.load %arg4[%c0_5, %c0_6] : memref<64x128xbf16, #tpu.memory_space<vmem>>, vector<64x128xbf16>
    %9 = arith.extf %8 : vector<64x128xbf16> to vector<64x128xf32>
    %10 = arith.addf %7, %9 : vector<64x128xf32>
    %cst = arith.constant 0.000000e+00 : f32
    %11 = vector.broadcast %cst : f32 to vector<64x128xf32>
    %12 = arith.maximumf %10, %11 : vector<64x128xf32>
    %13 = arith.truncf %12 : vector<64x128xf32> to vector<64x128xbf16>
    %c0_7 = arith.constant 0 : index
    %c0_8 = arith.constant 0 : index
    %14 = vector.load %arg5[%c0_7, %c0_8] : memref<64x128xbf16, #tpu.memory_space<vmem>>, vector<64x128xbf16>
    tpu.vector_store %arg5[%c0_7, %c0_8], %13 {strides = array<i32>} : memref<64x128xbf16, #tpu.memory_space<vmem>>, vector<64x128xbf16>,
    return
  }
  func.func @transform_0(%arg0: i32) -> (i32, i32) {
    %c0_i32 = arith.constant 0 : i32
    %c0_i32_0 = arith.constant 0 : i32
    return %arg0, %c0_i32 : i32, i32
  }
  func.func @transform_1(%arg0: i32) -> (i32, i32) {
    %c0_i32 = arith.constant 0 : i32
    %c0_i32_0 = arith.constant 0 : i32
    %c0_i32_1 = arith.constant 0 : i32
    return %c0_i32, %c0_i32_0 : i32, i32
  }
  func.func @transform_2(%arg0: i32) -> (i32, i32) {
    %c0_i32 = arith.constant 0 : i32
    %c0_i32_0 = arith.constant 0 : i32
    %c0_i32_1 = arith.constant 0 : i32
    return %c0_i32, %c0_i32_0 : i32, i32
  }
  func.func @transform_3(%arg0: i32) -> (i32, i32) {
    %c0_i32 = arith.constant 0 : i32
    %c0_i32_0 = arith.constant 0 : i32
    return %arg0, %c0_i32 : i32, i32
  }
  func.func @transform_4(%arg0: i32) -> (i32, i32) {
    %c0_i32 = arith.constant 0 : i32
    %c0_i32_0 = arith.constant 0 : i32
    return %arg0, %c0_i32 : i32, i32
  }
}

</mosaic_0001>

<llo_original>
// kernel: basic_block_forward.3
$region0: #{basic_block_forward.3}
  #allocation0 [shape = 'u32[]', space=smem, size = 0x4, offset = 0x4, fixed_abs, tag = 'smem constant byte address 0x4 - core index']
  #allocation1 [shape = 'u32[144,128]{1,0:T(1,128)}', space=vmem, size = 0x12000, scoped, tag = 'internal scratch']
  %s0 = inlined_call_operand.vmem [shape: bf16[512,128], index: 0, kind: input, shape index: {}]
  %s1 = inlined_call_operand.vmem [shape: bf16[128,128], index: 1, kind: input, shape index: {}]
  %s2 = inlined_call_operand.vmem [shape: bf16[512,128], index: 2, kind: output, shape index: {0}]
  %s3 = inlined_call_operand.vmem [shape: f32[64,128], index: 3, kind: output, shape index: {1}]
  %s4 = inlined_call_operand.vmem [shape: f32[64,128], index: 4, kind: output, shape index: {2}]
  %5 = xla_tuple %s2, %s3, %s4
  %s6 = sld [smem:[#allocation0]]
  $region57: #{basic_block_forward.3} parent=0
    _
  %s8 = ssub.s32 1, %s6
  %s9 = scalar_select 0, %s8, %s6
  loop: start=0, step=1, limit=10
  $region2: #{basic_block_forward.3} parent=0 // loop_pre_header
    _
  $region3: #{basic_block_forward.3} parent=0 // loop_header
    %s11 = sphi 0, %s15
    %p12 = scmp.ge.s32.totalorder %s11, 10
    %s21 = sphi 0, %s23
    %s24 = sphi 0, %s21
    %s25 = sphi 0, %s24
    %s41 = sphi 0, %s25
    %s45 = sphi 0, %s45
    %s47 = sphi 0, %s45
    %s48 = sphi 0, %s47
    %s62 = sphi 0, %s48
    %s68 = sphi 0, %s70
    %s71 = sphi 0, %s68
    %s72 = sphi 0, %s71
    %s88 = sphi 0, %s72
    %s94 = sphi 0, %s96
    %s97 = sphi 0, %s94
    %s98 = sphi 0, %s97
    %s114 = sphi 0, %s98
    %s120 = sphi 0, %s122
    %s123 = sphi 0, %s120
    %s124 = sphi 0, %s123
    %s140 = sphi 0, %s124
  $region4: #{basic_block_forward.3} parent=0 // loop_header_branch
    %14 = sbr.rel (%p12) target = $region8
  $region5: #{basic_block_forward.3} parent=0 // loop_body
    %s16 = ssub.s32 %s11, 1
    %s17 = ssub.s32 %s11, 2
    %s18 = sadd.s32 %s11, 1
    %s19 = ssub.s32 %s11, %s18
    %p20 = scmp.eq.s32.totalorder %s19, 0
    %s22 = sadd.s32 %s21, 1
    %s23 = scalar_select %p20, %s21, %s22
    %p26 = pneg %p20
    %p27 = scmp.eq.s32.totalorder %s11, 7
    %p28 = por %p26, %p27
    %p29 = scmp.ne.s32.totalorder %s21, %s24
    %p30 = scmp.eq.s32.totalorder %s11, 0
    %p31 = por %p29, %p30
    %p32 = scmp.ne.s32.totalorder %s21, %s24
    %p33 = scmp.eq.s32.totalorder %s16, 7
    %p34 = por %p32, %p33
    %p35 = scmp.ne.s32.totalorder %s24, %s25
    %p36 = scmp.eq.s32.totalorder %s16, 0
    %p37 = por %p35, %p36
    %p38 = scmp.ne.s32.totalorder %s24, %s25
    %p39 = scmp.eq.s32.totalorder %s17, 7
    %p40 = por %p38, %p39
    %p42 = scmp.ne.s32.totalorder %s25, %s41
    %p43 = scmp.eq.s32.totalorder %s17, 0
    %p44 = por %p42, %p43
    %s46 = sadd.s32 %s45, 1
    %p49 = scmp.eq.s32.totalorder %s11, 7
    %p50 = scmp.ne.s32.totalorder %s45, %s47
    %p51 = scmp.eq.s32.totalorder %s11, 0
    %p52 = por %p50, %p51
    %p53 = scmp.ne.s32.totalorder %s45, %s47
    %p54 = scmp.eq.s32.totalorder %s16, 7
    %p55 = por %p53, %p54
    %p56 = scmp.ne.s32.totalorder %s47, %s48
    %p57 = scmp.eq.s32.totalorder %s16, 0
    %p58 = por %p56, %p57
    %p59 = scmp.ne.s32.totalorder %s47, %s48
    %p60 = scmp.eq.s32.totalorder %s17, 7
    %p61 = por %p59, %p60
    %p63 = scmp.ne.s32.totalorder %s48, %s62
    %p64 = scmp.eq.s32.totalorder %s17, 0
    %p65 = por %p63, %p64
    %s66 = ssub.s32 %s11, %s18
    %p67 = scmp.eq.s32.totalorder %s66, 0
    %s69 = sadd.s32 %s68, 1
    %s70 = scalar_select %p67, %s68, %s69
    %p73 = pneg %p67
    %p74 = scmp.eq.s32.totalorder %s11, 7
    %p75 = por %p73, %p74
    %p76 = scmp.ne.s32.totalorder %s68, %s71
    %p77 = scmp.eq.s32.totalorder %s11, 0
    %p78 = por %p76, %p77
    %p79 = scmp.ne.s32.totalorder %s68, %s71
    %p80 = scmp.eq.s32.totalorder %s16, 7
    %p81 = por %p79, %p80
    %p82 = scmp.ne.s32.totalorder %s71, %s72
    %p83 = scmp.eq.s32.totalorder %s16, 0
    %p84 = por %p82, %p83
    %p85 = scmp.ne.s32.totalorder %s71, %s72
    %p86 = scmp.eq.s32.totalorder %s17, 7
    %p87 = por %p85, %p86
    %p89 = scmp.ne.s32.totalorder %s72, %s88
    %p90 = scmp.eq.s32.totalorder %s17, 0
    %p91 = por %p89, %p90
    %s92 = ssub.s32 %s11, %s18
    %p93 = scmp.eq.s32.totalorder %s92, 0
    %s95 = sadd.s32 %s94, 1
    %s96 = scalar_select %p93, %s94, %s95
    %p99 = pneg %p93
    %p100 = scmp.eq.s32.totalorder %s11, 7
    %p101 = por %p99, %p100
    %p102 = scmp.ne.s32.totalorder %s94, %s97
    %p103 = scmp.eq.s32.totalorder %s11, 0
    %p104 = por %p102, %p103
    %p105 = scmp.ne.s32.totalorder %s94, %s97
    %p106 = scmp.eq.s32.totalorder %s16, 7
    %p107 = por %p105, %p106
    %p108 = scmp.ne.s32.totalorder %s97, %s98
    %p109 = scmp.eq.s32.totalorder %s16, 0
    %p110 = por %p108, %p109
    %p111 = scmp.ne.s32.totalorder %s97, %s98
    %p112 = scmp.eq.s32.totalorder %s17, 7
    %p113 = por %p111, %p112
    %p115 = scmp.ne.s32.totalorder %s98, %s114
    %p116 = scmp.eq.s32.totalorder %s17, 0
    %p117 = por %p115, %p116
    %s118 = ssub.s32 %s11, %s18
    %p119 = scmp.eq.s32.totalorder %s118, 0
    %s121 = sadd.s32 %s120, 1
    %s122 = scalar_select %p119, %s120, %s121
    %p125 = pneg %p119
    %p126 = scmp.eq.s32.totalorder %s11, 7
    %p127 = por %p125, %p126
    %p128 = scmp.ne.s32.totalorder %s120, %s123
    %p129 = scmp.eq.s32.totalorder %s11, 0
    %p130 = por %p128, %p129
    %p131 = scmp.ne.s32.totalorder %s120, %s123
    %p132 = scmp.eq.s32.totalorder %s16, 7
    %p133 = por %p131, %p132
    %p134 = scmp.ne.s32.totalorder %s123, %s124
    %p135 = scmp.eq.s32.totalorder %s16, 0
    %p136 = por %p134, %p135
    %p137 = scmp.ne.s32.totalorder %s123, %s124
    %p138 = scmp.eq.s32.totalorder %s17, 7
    %p139 = por %p137, %p138
    %p141 = scmp.ne.s32.totalorder %s124, %s140
    %p142 = scmp.eq.s32.totalorder %s17, 0
    %p143 = por %p141, %p142
    %p144 = scmp.le.s32.totalorder 1, %s11
    %p145 = scmp.lt.s32.totalorder %s11, 9
    %p146 = pnand %p144, %p145
    %p147 = pneg %p146
    // Predicated region
    $region9: #{basic_block_forward.3} parent=5 // pred_check
      _
    $region10: #{basic_block_forward.3} parent=5 // pred_check_branch
      %149 = sbr.rel (%p146) target = $region12
    $region11: #{basic_block_forward.3} parent=5 // pred_region
      %s150 = ssub.s32 %s11, 1
      // Predicated region
      $region13: #{basic_block_forward.3} parent=11 // pred_check
        %p151 = pneg %p58
      $region14: #{basic_block_forward.3} parent=11 // pred_check_branch
        %153 = sbr.rel (%p151) target = $region16
      $region15: #{basic_block_forward.3} parent=11 // pred_region
        _
      $region16: #{basic_block_forward.3} parent=11 // pred_fallthru
        _
    $region12: #{basic_block_forward.3} parent=5 // pred_fallthru
      _
    %p154 = scmp.lt.s32.totalorder %s11, 8
    // Predicated region
    $region17: #{basic_block_forward.3} parent=5 // pred_check
      %p155 = pneg %p154
    $region18: #{basic_block_forward.3} parent=5 // pred_check_branch
      %157 = sbr.rel (%p155) target = $region20
    $region19: #{basic_block_forward.3} parent=5 // pred_region
      // Predicated region
      $region21: #{basic_block_forward.3} parent=19 // pred_check
        %p158 = pneg %p31
      $region22: #{basic_block_forward.3} parent=19 // pred_check_branch
        %160 = sbr.rel (%p158) target = $region24
      $region23: #{basic_block_forward.3} parent=19 // pred_region
        %s161 = smul.u32 8, %s11
        %p162 = scmp.lt.s32.totalorder %s161, 63
        %s163 = scalar_select %p162, %s161, 63
        %s164 = smul.addr %s163, 4
        %s165 = scalar_lea.vmem %s0, %s164
        %s166 = smul.u32 8, %s11
      $region24: #{basic_block_forward.3} parent=19 // pred_fallthru
        _
    $region20: #{basic_block_forward.3} parent=5 // pred_fallthru
      _
    %p167 = scmp.le.s32.totalorder 1, %s11
    %p168 = scmp.lt.s32.totalorder %s11, 9
    %p169 = pnand %p167, %p168
    %p170 = pneg %p169
    // Predicated region
    $region25: #{basic_block_forward.3} parent=5 // pred_check
      _
    $region26: #{basic_block_forward.3} parent=5 // pred_check_branch
      %172 = sbr.rel (%p169) target = $region28
    $region27: #{basic_block_forward.3} parent=5 // pred_region
      %s173 = ssub.s32 %s11, 1
      %s174 = smul.u32 8, %s16
      %p175 = scmp.lt.s32.totalorder %s174, 63
      %s176 = scalar_select %p175, %s174, 63
      %s177 = smul.addr %s176, 4
      %s178 = scalar_lea.vmem %s0, %s177
      %p179 = pneg %p37
      %p180 = pneg %p34
      %p181 = pneg %p58
      %p182 = pneg %p55
      %p183 = pneg %p84
      %p184 = pneg %p81
      %s185 = smul.u32 8, %s16
      %p186 = scmp.lt.s32.totalorder %s185, 63
      %s187 = scalar_select %p186, %s185, 63
      %s188 = smul.addr %s187, 4
      %s189 = scalar_lea.vmem %s2, %s188
      %p190 = pneg %p110
      %p191 = pneg %p107
      %p192 = scmp.lt.s32.totalorder %s16, 7
      %s193 = scalar_select %p192, %s16, 7
      %s194 = smul.addr %s193, 8
      %s195 = scalar_lea.vmem %s3, %s194
      %p196 = pneg %p136
      %p197 = pneg %p133
      %p198 = scmp.lt.s32.totalorder %s16, 7
      %s199 = scalar_select %p198, %s16, 7
      %s200 = smul.addr %s199, 8
      %s201 = scalar_lea.vmem %s4, %s200
      %s202 = smul.u32 8, %s16
      %p203 = scmp.lt.s32.totalorder %s202, 63
      %s204 = scalar_select %p203, %s202, 63
      %s205 = smul.addr %s204, 4
      %s206 = scalar_lea.vmem %s0, %s205
      %s207 = smul.u32 8, %s16
      %s208 = smul.u32 8, %s16
      %p209 = scmp.lt.s32.totalorder %s208, 63
      %s210 = scalar_select %p209, %s208, 63
      %s211 = smul.addr %s210, 4
      %s212 = scalar_lea.vmem %s2, %s211
      %s213 = smul.u32 8, %s16
      %p214 = scmp.lt.s32.totalorder %s16, 7
      %s215 = scalar_select %p214, %s16, 7
      %s216 = smul.addr %s215, 8
      %s217 = scalar_lea.vmem %s3, %s216
      %p218 = scmp.lt.s32.totalorder %s16, 7
      %s219 = scalar_select %p218, %s16, 7
      %s220 = smul.addr %s219, 8
      %s221 = scalar_lea.vmem %s4, %s220
      %v223 = vld [vmem:[%s206] sm:$0xf]
      %v224 = vld [vmem:[%s206 + $0x4] sm:$0xf]
      %v225 = vld [vmem:[%s206 + $0x8] sm:$0xf]
      %v226 = vld [vmem:[%s206 + $0xc] sm:$0xf]
      %v227 = vld [vmem:[%s206 + $0x10] sm:$0xf]
      %v228 = vld [vmem:[%s206 + $0x14] sm:$0xf]
      %v229 = vld [vmem:[%s206 + $0x18] sm:$0xf]
      %v230 = vld [vmem:[%s206 + $0x1c] sm:$0xf]
      %v231 = vld [vmem:[%s1] sm:$0xf]
      %v232 = vld [vmem:[%s1 + $0x4] sm:$0xf]
      %v233 = vld [vmem:[%s1 + $0x8] sm:$0xf]
      %v234 = vld [vmem:[%s1 + $0xc] sm:$0xf]
      %v235 = vld [vmem:[%s1 + $0x10] sm:$0xf]
      %v236 = vld [vmem:[%s1 + $0x14] sm:$0xf]
      %v237 = vld [vmem:[%s1 + $0x18] sm:$0xf]
      %v238 = vld [vmem:[%s1 + $0x1c] sm:$0xf]
      %v239 = vld [vmem:[%s1 + $0x20] sm:$0xf]
      %v240 = vld [vmem:[%s1 + $0x24] sm:$0xf]
      %v241 = vld [vmem:[%s1 + $0x28] sm:$0xf]
      %v242 = vld [vmem:[%s1 + $0x2c] sm:$0xf]
      %v243 = vld [vmem:[%s1 + $0x30] sm:$0xf]
      %v244 = vld [vmem:[%s1 + $0x34] sm:$0xf]
      %v245 = vld [vmem:[%s1 + $0x38] sm:$0xf]
      %v246 = vld [vmem:[%s1 + $0x3c] sm:$0xf]
      %v255 = vunpack.c.l.b16 %v223
      %v256 = vunpack.c.l.b16 %v224
      %v257 = vunpack.c.l.b16 %v225
      %v258 = vunpack.c.l.b16 %v226
      %v259 = vunpack.c.l.b16 %v227
      %v260 = vunpack.c.l.b16 %v228
      %v261 = vunpack.c.l.b16 %v229
      %v262 = vunpack.c.l.b16 %v230
      %v263 = vpack.c.b16 %v256, %v255
      %v264 = vpack.c.b16 %v258, %v257
      %v265 = vpack.c.b16 %v260, %v259
      %v266 = vpack.c.b16 %v262, %v261
      %v287 = vunpack.c.l.b16 %v231
      %v288 = vunpack.c.l.b16 %v232
      %v289 = vunpack.c.l.b16 %v233
      %v290 = vunpack.c.l.b16 %v234
      %v291 = vunpack.c.l.b16 %v235
      %v292 = vunpack.c.l.b16 %v236
      %v293 = vunpack.c.l.b16 %v237
      %v294 = vunpack.c.l.b16 %v238
      %v295 = vunpack.c.l.b16 %v239
      %v296 = vunpack.c.l.b16 %v240
      %v297 = vunpack.c.l.b16 %v241
      %v298 = vunpack.c.l.b16 %v242
      %v299 = vunpack.c.l.b16 %v243
      %v300 = vunpack.c.l.b16 %v244
      %v301 = vunpack.c.l.b16 %v245
      %v302 = vunpack.c.l.b16 %v246
      %v303 = vpack.c.b16 %v288, %v287
      %v304 = vpack.c.b16 %v290, %v289
      %v305 = vpack.c.b16 %v292, %v291
      %v306 = vpack.c.b16 %v294, %v293
      %v307 = vpack.c.b16 %v296, %v295
      %v308 = vpack.c.b16 %v298, %v297
      %v309 = vpack.c.b16 %v300, %v299
      %v310 = vpack.c.b16 %v302, %v301
      %319 = vmatprep.subr.bf16.mxu0 0
      %320 = vmatpush1.bf16.msra.mxu0 %v303
      %321 = vmatprep.subr.bf16.mxu0 0
      %322 = vmatpush1.bf16.msra.mxu0 %v304
      %323 = vmatprep.subr.bf16.mxu0 0
      %324 = vmatpush1.bf16.msra.mxu0 %v305
      %325 = vmatprep.subr.bf16.mxu0 0
      %326 = vmatpush1.bf16.msra.mxu0 %v306
      %327 = vmatprep.subr.bf16.mxu0 0
      %328 = vmatpush1.bf16.msra.mxu0 %v307
      %329 = vmatprep.subr.bf16.mxu0 0
      %330 = vmatpush1.bf16.msra.mxu0 %v308
      %331 = vmatprep.subr.bf16.mxu0 0
      %332 = vmatpush1.bf16.msra.mxu0 %v309
      %333 = vmatprep.subr.bf16.mxu0 0
      %334 = vmatpush1.bf16.msra.mxu0 %v310
      %335 = vmatprep.subr.bf16.mxu0 0
      %336 = vmatpush1.bf16.msra.mxu0 0
      %337 = vmatprep.subr.bf16.mxu0 0
      %338 = vmatpush1.bf16.msra.mxu0 0
      %339 = vmatprep.subr.bf16.mxu0 0
      %340 = vmatpush1.bf16.msra.mxu0 0
      %341 = vmatprep.subr.bf16.mxu0 0
      %342 = vmatpush1.bf16.msra.mxu0 0
      %343 = vmatprep.subr.bf16.mxu0 0
      %344 = vmatpush1.bf16.msra.mxu0 0
      %345 = vmatprep.subr.bf16.mxu0 0
      %346 = vmatpush1.bf16.msra.mxu0 0
      %347 = vmatprep.subr.bf16.mxu0 0
      %348 = vmatpush1.bf16.msra.mxu0 0
      %349 = vmatprep.subr.bf16.mxu0 0
      %350 = vmatpush1.bf16.msra.mxu0 0
      %351 = vmatprep.mubr.bf16.mxu0 0
      %352 = vmatmul.mubr.bf16.gmra.mrb[0].mxu0 %v263
      %v353 = vpop.f32.mrb[0].mxu0
      %v354 = vadd.f32 0.0, %v353
      %v355 = vpop.f32.mrb[0].mxu0
      %v356 = vpop.f32.mrb[0].mxu0
      %v357 = vadd.f32 0.0, %v356
      %v358 = vpop.f32.mrb[0].mxu0
      %359 = vmatprep.mubr.bf16.mxu0 0
      %360 = vmatmul.mubr.bf16.gmra.mrb[0].mxu0 %v264
      %v361 = vpop.f32.mrb[0].mxu0
      %v362 = vadd.f32 0.0, %v361
      %v363 = vpop.f32.mrb[0].mxu0
      %v364 = vpop.f32.mrb[0].mxu0
      %v365 = vadd.f32 0.0, %v364
      %v366 = vpop.f32.mrb[0].mxu0
      %367 = vmatprep.mubr.bf16.mxu0 0
      %368 = vmatmul.mubr.bf16.gmra.mrb[0].mxu0 %v265
      %v369 = vpop.f32.mrb[0].mxu0
      %v370 = vadd.f32 0.0, %v369
      %v371 = vpop.f32.mrb[0].mxu0
      %v372 = vpop.f32.mrb[0].mxu0
      %v373 = vadd.f32 0.0, %v372
      %v374 = vpop.f32.mrb[0].mxu0
      %375 = vmatprep.mubr.bf16.mxu0 0
      %376 = vmatmul.mubr.bf16.gmra.mrb[0].mxu0 %v266
      %v377 = vpop.f32.mrb[0].mxu0
      %v378 = vadd.f32 0.0, %v377
      %v379 = vpop.f32.mrb[0].mxu0
      %v380 = vpop.f32.mrb[0].mxu0
      %v381 = vadd.f32 0.0, %v380
      %v382 = vpop.f32.mrb[0].mxu0
      %383 = vdwg.mxu0
      %v384 = vpack.c.bf16 %v357, %v354
      %v385 = vpack.c.bf16 %v365, %v362
      %v386 = vpack.c.bf16 %v373, %v370
      %v387 = vpack.c.bf16 %v381, %v378
      %v392 = vunpack.c.l.b16 %v384
      %v393 = vunpack.c.h.b16 %v384
      %v394 = vunpack.c.l.b16 %v385
      %v395 = vunpack.c.h.b16 %v385
      %v396 = vunpack.c.l.b16 %v386
      %v397 = vunpack.c.h.b16 %v386
      %v398 = vunpack.c.l.b16 %v387
      %v399 = vunpack.c.h.b16 %v387
      %v400 = vpack.c.b16 %v392, %v392
      %v401 = vpack.c.b16 %v393, %v393
      %v402 = vpack.c.b16 %v394, %v394
      %v403 = vpack.c.b16 %v395, %v395
      %v404 = vpack.c.b16 %v396, %v396
      %v405 = vpack.c.b16 %v397, %v397
      %v406 = vpack.c.b16 %v398, %v398
      %v407 = vpack.c.b16 %v399, %v399
      %416 = vst [vmem:[%s212] sm:$0xf] %v400
      %417 = vst [vmem:[%s212 + $0x4] sm:$0xf] %v401
      %418 = vst [vmem:[%s212 + $0x8] sm:$0xf] %v402
      %419 = vst [vmem:[%s212 + $0xc] sm:$0xf] %v403
      %420 = vst [vmem:[%s212 + $0x10] sm:$0xf] %v404
      %421 = vst [vmem:[%s212 + $0x14] sm:$0xf] %v405
      %422 = vst [vmem:[%s212 + $0x18] sm:$0xf] %v406
      %423 = vst [vmem:[%s212 + $0x1c] sm:$0xf] %v407
      %v424 = vadd.f32 %v354, %v357
      %v425 = vadd.f32 %v424, %v362
      %v426 = vadd.f32 %v425, %v365
      %v427 = vadd.f32 %v426, %v370
      %v428 = vadd.f32 %v427, %v373
      %v429 = vadd.f32 %v428, %v378
      %v430 = vadd.f32 %v429, %v381
      %v431 = vrot.slane %v430, 4
      %v432 = vadd.f32 %v430, %v431
      %v433 = vrot.slane %v432, 2
      %v434 = vadd.f32 %v432, %v433
      %v435 = vrot.slane %v434, 1
      %v436 = vadd.f32 %v434, %v435
      %v437 = vmul.f32 %v354, %v354
      %v438 = vmul.f32 %v357, %v357
      %v439 = vmul.f32 %v362, %v362
      %v440 = vmul.f32 %v365, %v365
      %v441 = vmul.f32 %v370, %v370
      %v442 = vmul.f32 %v373, %v373
      %v443 = vmul.f32 %v378, %v378
      %v444 = vmul.f32 %v381, %v381
      %v445 = vadd.f32 %v437, %v438
      %v446 = vadd.f32 %v445, %v439
      %v447 = vadd.f32 %v446, %v440
      %v448 = vadd.f32 %v447, %v441
      %v449 = vadd.f32 %v448, %v442
      %v450 = vadd.f32 %v449, %v443
      %v451 = vadd.f32 %v450, %v444
      %v452 = vrot.slane %v451, 4
      %v453 = vadd.f32 %v451, %v452
      %v454 = vrot.slane %v453, 2
      %v455 = vadd.f32 %v453, %v454
      %v456 = vrot.slane %v455, 1
      %v457 = vadd.f32 %v455, %v456
      %458 = vst [vmem:[%s217] sm:$0xff] %v436
      %459 = vst [vmem:[%s221] sm:$0xff] %v457
      %s460 = smul.u32 8, %s16
      %p461 = scmp.lt.s32.totalorder %s460, 63
      %s462 = scalar_select %p461, %s460, 63
      %s463 = smul.addr %s462, 4
      %s464 = scalar_lea.vmem %s2, %s463
      %p465 = scmp.lt.s32.totalorder %s16, 7
      %s466 = scalar_select %p465, %s16, 7
      %s467 = smul.addr %s466, 8
      %s468 = scalar_lea.vmem %s3, %s467
      %p469 = scmp.lt.s32.totalorder %s16, 7
      %s470 = scalar_select %p469, %s16, 7
      %s471 = smul.addr %s470, 8
      %s472 = scalar_lea.vmem %s4, %s471
      // Predicated region
      $region29: #{basic_block_forward.3} parent=27 // pred_check
        %p473 = pneg %p81
      $region30: #{basic_block_forward.3} parent=27 // pred_check_branch
        %475 = sbr.rel (%p473) target = $region32
      $region31: #{basic_block_forward.3} parent=27 // pred_region
        %s476 = smul.u32 8, %s16
      $region32: #{basic_block_forward.3} parent=27 // pred_fallthru
        _
      // Predicated region
      $region33: #{basic_block_forward.3} parent=27 // pred_check
        %p477 = pneg %p107
      $region34: #{basic_block_forward.3} parent=27 // pred_check_branch
        %479 = sbr.rel (%p477) target = $region36
      $region35: #{basic_block_forward.3} parent=27 // pred_region
        _
      $region36: #{basic_block_forward.3} parent=27 // pred_fallthru
        _
      // Predicated region
      $region37: #{basic_block_forward.3} parent=27 // pred_check
        %p480 = pneg %p133
      $region38: #{basic_block_forward.3} parent=27 // pred_check_branch
        %482 = sbr.rel (%p480) target = $region40
      $region39: #{basic_block_forward.3} parent=27 // pred_region
        _
      $region40: #{basic_block_forward.3} parent=27 // pred_fallthru
        _
    $region28: #{basic_block_forward.3} parent=5 // pred_fallthru
      _
    %p483 = scmp.le.s32.totalorder 2, %s11
    // Predicated region
    $region41: #{basic_block_forward.3} parent=5 // pred_check
      %p484 = pneg %p483
    $region42: #{basic_block_forward.3} parent=5 // pred_check_branch
      %486 = sbr.rel (%p484) target = $region44
    $region43: #{basic_block_forward.3} parent=5 // pred_region
      %s487 = ssub.s32 %s11, 2
      // Predicated region
      $region45: #{basic_block_forward.3} parent=43 // pred_check
        %p488 = pneg %p87
      $region46: #{basic_block_forward.3} parent=43 // pred_check_branch
        %490 = sbr.rel (%p488) target = $region48
      $region47: #{basic_block_forward.3} parent=43 // pred_region
        %s491 = smul.u32 8, %s17
        %p492 = scmp.lt.s32.totalorder %s491, 63
        %s493 = scalar_select %p492, %s491, 63
        %s494 = smul.addr %s493, 4
        %s495 = scalar_lea.vmem %s2, %s494
      $region48: #{basic_block_forward.3} parent=43 // pred_fallthru
        _
      // Predicated region
      $region49: #{basic_block_forward.3} parent=43 // pred_check
        %p496 = pneg %p113
      $region50: #{basic_block_forward.3} parent=43 // pred_check_branch
        %498 = sbr.rel (%p496) target = $region52
      $region51: #{basic_block_forward.3} parent=43 // pred_region
        %p499 = scmp.lt.s32.totalorder %s17, 7
        %s500 = scalar_select %p499, %s17, 7
        %s501 = smul.addr %s500, 8
        %s502 = scalar_lea.vmem %s3, %s501
      $region52: #{basic_block_forward.3} parent=43 // pred_fallthru
        _
      // Predicated region
      $region53: #{basic_block_forward.3} parent=43 // pred_check
        %p503 = pneg %p139
      $region54: #{basic_block_forward.3} parent=43 // pred_check_branch
        %505 = sbr.rel (%p503) target = $region56
      $region55: #{basic_block_forward.3} parent=43 // pred_region
        %p506 = scmp.lt.s32.totalorder %s17, 7
        %s507 = scalar_select %p506, %s17, 7
        %s508 = smul.addr %s507, 8
        %s509 = scalar_lea.vmem %s4, %s508
      $region56: #{basic_block_forward.3} parent=43 // pred_fallthru
        _
    $region44: #{basic_block_forward.3} parent=5 // pred_fallthru
      _
  $region6: #{basic_block_forward.3} parent=0 // loop_footer
    %s15 = sadd.s32 1, %s11
  $region7: #{basic_block_forward.3} parent=0 // loop_footer_branch
    %10 = sbr.rel target = $region3
  $region8: #{basic_block_forward.3} parent=0 // loop_exit
    _

// kernel: basic_block_forward.5
$region0: #{basic_block_forward.5}
  #allocation0 [shape = 'u32[]', space=smem, size = 0x4, offset = 0x4, fixed_abs, tag = 'smem constant byte address 0x4 - core index']
  #allocation1 [shape = 'u32[144,128]{1,0:T(1,128)}', space=vmem, size = 0x12000, scoped, tag = 'internal scratch']
  %s0 = inlined_call_operand.vmem [shape: bf16[512,128], index: 0, kind: input, shape index: {}]
  %s1 = inlined_call_operand.vmem [shape: f32[1,128], index: 1, kind: input, shape index: {}]
  %s2 = inlined_call_operand.vmem [shape: f32[1,128], index: 2, kind: input, shape index: {}]
  %s3 = inlined_call_operand.vmem [shape: bf16[512,128], index: 3, kind: input, shape index: {}]
  %s4 = inlined_call_operand.vmem [shape: bf16[512,128], index: 4, kind: output, shape index: {}]
  %s5 = sld [smem:[#allocation0]]
  $region49: #{basic_block_forward.5} parent=0
    _
  %s7 = ssub.s32 1, %s5
  %s8 = scalar_select 0, %s7, %s5
  loop: start=0, step=1, limit=10
  $region2: #{basic_block_forward.5} parent=0 // loop_pre_header
    _
  $region3: #{basic_block_forward.5} parent=0 // loop_header
    %s10 = sphi 0, %s14
    %p11 = scmp.ge.s32.totalorder %s10, 10
    %s20 = sphi 0, %s22
    %s23 = sphi 0, %s20
    %s24 = sphi 0, %s23
    %s40 = sphi 0, %s24
    %s44 = sphi 0, %s44
    %s46 = sphi 0, %s44
    %s47 = sphi 0, %s46
    %s61 = sphi 0, %s47
    %s65 = sphi 0, %s65
    %s67 = sphi 0, %s65
    %s68 = sphi 0, %s67
    %s82 = sphi 0, %s68
    %s88 = sphi 0, %s90
    %s91 = sphi 0, %s88
    %s92 = sphi 0, %s91
    %s108 = sphi 0, %s92
    %s114 = sphi 0, %s116
    %s117 = sphi 0, %s114
    %s118 = sphi 0, %s117
    %s134 = sphi 0, %s118
  $region4: #{basic_block_forward.5} parent=0 // loop_header_branch
    %13 = sbr.rel (%p11) target = $region8
  $region5: #{basic_block_forward.5} parent=0 // loop_body
    %s15 = ssub.s32 %s10, 1
    %s16 = ssub.s32 %s10, 2
    %s17 = sadd.s32 %s10, 1
    %s18 = ssub.s32 %s10, %s17
    %p19 = scmp.eq.s32.totalorder %s18, 0
    %s21 = sadd.s32 %s20, 1
    %s22 = scalar_select %p19, %s20, %s21
    %p25 = pneg %p19
    %p26 = scmp.eq.s32.totalorder %s10, 7
    %p27 = por %p25, %p26
    %p28 = scmp.ne.s32.totalorder %s20, %s23
    %p29 = scmp.eq.s32.totalorder %s10, 0
    %p30 = por %p28, %p29
    %p31 = scmp.ne.s32.totalorder %s20, %s23
    %p32 = scmp.eq.s32.totalorder %s15, 7
    %p33 = por %p31, %p32
    %p34 = scmp.ne.s32.totalorder %s23, %s24
    %p35 = scmp.eq.s32.totalorder %s15, 0
    %p36 = por %p34, %p35
    %p37 = scmp.ne.s32.totalorder %s23, %s24
    %p38 = scmp.eq.s32.totalorder %s16, 7
    %p39 = por %p37, %p38
    %p41 = scmp.ne.s32.totalorder %s24, %s40
    %p42 = scmp.eq.s32.totalorder %s16, 0
    %p43 = por %p41, %p42
    %s45 = sadd.s32 %s44, 1
    %p48 = scmp.eq.s32.totalorder %s10, 7
    %p49 = scmp.ne.s32.totalorder %s44, %s46
    %p50 = scmp.eq.s32.totalorder %s10, 0
    %p51 = por %p49, %p50
    %p52 = scmp.ne.s32.totalorder %s44, %s46
    %p53 = scmp.eq.s32.totalorder %s15, 7
    %p54 = por %p52, %p53
    %p55 = scmp.ne.s32.totalorder %s46, %s47
    %p56 = scmp.eq.s32.totalorder %s15, 0
    %p57 = por %p55, %p56
    %p58 = scmp.ne.s32.totalorder %s46, %s47
    %p59 = scmp.eq.s32.totalorder %s16, 7
    %p60 = por %p58, %p59
    %p62 = scmp.ne.s32.totalorder %s47, %s61
    %p63 = scmp.eq.s32.totalorder %s16, 0
    %p64 = por %p62, %p63
    %s66 = sadd.s32 %s65, 1
    %p69 = scmp.eq.s32.totalorder %s10, 7
    %p70 = scmp.ne.s32.totalorder %s65, %s67
    %p71 = scmp.eq.s32.totalorder %s10, 0
    %p72 = por %p70, %p71
    %p73 = scmp.ne.s32.totalorder %s65, %s67
    %p74 = scmp.eq.s32.totalorder %s15, 7
    %p75 = por %p73, %p74
    %p76 = scmp.ne.s32.totalorder %s67, %s68
    %p77 = scmp.eq.s32.totalorder %s15, 0
    %p78 = por %p76, %p77
    %p79 = scmp.ne.s32.totalorder %s67, %s68
    %p80 = scmp.eq.s32.totalorder %s16, 7
    %p81 = por %p79, %p80
    %p83 = scmp.ne.s32.totalorder %s68, %s82
    %p84 = scmp.eq.s32.totalorder %s16, 0
    %p85 = por %p83, %p84
    %s86 = ssub.s32 %s10, %s17
    %p87 = scmp.eq.s32.totalorder %s86, 0
    %s89 = sadd.s32 %s88, 1
    %s90 = scalar_select %p87, %s88, %s89
    %p93 = pneg %p87
    %p94 = scmp.eq.s32.totalorder %s10, 7
    %p95 = por %p93, %p94
    %p96 = scmp.ne.s32.totalorder %s88, %s91
    %p97 = scmp.eq.s32.totalorder %s10, 0
    %p98 = por %p96, %p97
    %p99 = scmp.ne.s32.totalorder %s88, %s91
    %p100 = scmp.eq.s32.totalorder %s15, 7
    %p101 = por %p99, %p100
    %p102 = scmp.ne.s32.totalorder %s91, %s92
    %p103 = scmp.eq.s32.totalorder %s15, 0
    %p104 = por %p102, %p103
    %p105 = scmp.ne.s32.totalorder %s91, %s92
    %p106 = scmp.eq.s32.totalorder %s16, 7
    %p107 = por %p105, %p106
    %p109 = scmp.ne.s32.totalorder %s92, %s108
    %p110 = scmp.eq.s32.totalorder %s16, 0
    %p111 = por %p109, %p110
    %s112 = ssub.s32 %s10, %s17
    %p113 = scmp.eq.s32.totalorder %s112, 0
    %s115 = sadd.s32 %s114, 1
    %s116 = scalar_select %p113, %s114, %s115
    %p119 = pneg %p113
    %p120 = scmp.eq.s32.totalorder %s10, 7
    %p121 = por %p119, %p120
    %p122 = scmp.ne.s32.totalorder %s114, %s117
    %p123 = scmp.eq.s32.totalorder %s10, 0
    %p124 = por %p122, %p123
    %p125 = scmp.ne.s32.totalorder %s114, %s117
    %p126 = scmp.eq.s32.totalorder %s15, 7
    %p127 = por %p125, %p126
    %p128 = scmp.ne.s32.totalorder %s117, %s118
    %p129 = scmp.eq.s32.totalorder %s15, 0
    %p130 = por %p128, %p129
    %p131 = scmp.ne.s32.totalorder %s117, %s118
    %p132 = scmp.eq.s32.totalorder %s16, 7
    %p133 = por %p131, %p132
    %p135 = scmp.ne.s32.totalorder %s118, %s134
    %p136 = scmp.eq.s32.totalorder %s16, 0
    %p137 = por %p135, %p136
    %p138 = scmp.le.s32.totalorder 1, %s10
    %p139 = scmp.lt.s32.totalorder %s10, 9
    %p140 = pnand %p138, %p139
    %p141 = pneg %p140
    // Predicated region
    $region9: #{basic_block_forward.5} parent=5 // pred_check
      _
    $region10: #{basic_block_forward.5} parent=5 // pred_check_branch
      %143 = sbr.rel (%p140) target = $region12
    $region11: #{basic_block_forward.5} parent=5 // pred_region
      %s144 = ssub.s32 %s10, 1
      // Predicated region
      $region13: #{basic_block_forward.5} parent=11 // pred_check
        %p145 = pneg %p57
      $region14: #{basic_block_forward.5} parent=11 // pred_check_branch
        %147 = sbr.rel (%p145) target = $region16
      $region15: #{basic_block_forward.5} parent=11 // pred_region
        _
      $region16: #{basic_block_forward.5} parent=11 // pred_fallthru
        _
      // Predicated region
      $region17: #{basic_block_forward.5} parent=11 // pred_check
        %p148 = pneg %p78
      $region18: #{basic_block_forward.5} parent=11 // pred_check_branch
        %150 = sbr.rel (%p148) target = $region20
      $region19: #{basic_block_forward.5} parent=11 // pred_region
        _
      $region20: #{basic_block_forward.5} parent=11 // pred_fallthru
        _
    $region12: #{basic_block_forward.5} parent=5 // pred_fallthru
      _
    %p151 = scmp.lt.s32.totalorder %s10, 8
    // Predicated region
    $region21: #{basic_block_forward.5} parent=5 // pred_check
      %p152 = pneg %p151
    $region22: #{basic_block_forward.5} parent=5 // pred_check_branch
      %154 = sbr.rel (%p152) target = $region24
    $region23: #{basic_block_forward.5} parent=5 // pred_region
      // Predicated region
      $region25: #{basic_block_forward.5} parent=23 // pred_check
        %p155 = pneg %p30
      $region26: #{basic_block_forward.5} parent=23 // pred_check_branch
        %157 = sbr.rel (%p155) target = $region28
      $region27: #{basic_block_forward.5} parent=23 // pred_region
        %s158 = smul.u32 8, %s10
        %p159 = scmp.lt.s32.totalorder %s158, 63
        %s160 = scalar_select %p159, %s158, 63
        %s161 = smul.addr %s160, 4
        %s162 = scalar_lea.vmem %s0, %s161
        %s163 = smul.u32 8, %s10
      $region28: #{basic_block_forward.5} parent=23 // pred_fallthru
        _
      // Predicated region
      $region29: #{basic_block_forward.5} parent=23 // pred_check
        %p164 = pneg %p98
      $region30: #{basic_block_forward.5} parent=23 // pred_check_branch
        %166 = sbr.rel (%p164) target = $region32
      $region31: #{basic_block_forward.5} parent=23 // pred_region
        %s167 = smul.u32 8, %s10
        %p168 = scmp.lt.s32.totalorder %s167, 63
        %s169 = scalar_select %p168, %s167, 63
        %s170 = smul.addr %s169, 4
        %s171 = scalar_lea.vmem %s3, %s170
        %s172 = smul.u32 8, %s10
      $region32: #{basic_block_forward.5} parent=23 // pred_fallthru
        _
    $region24: #{basic_block_forward.5} parent=5 // pred_fallthru
      _
    %p173 = scmp.le.s32.totalorder 1, %s10
    %p174 = scmp.lt.s32.totalorder %s10, 9
    %p175 = pnand %p173, %p174
    %p176 = pneg %p175
    // Predicated region
    $region33: #{basic_block_forward.5} parent=5 // pred_check
      _
    $region34: #{basic_block_forward.5} parent=5 // pred_check_branch
      %178 = sbr.rel (%p175) target = $region36
    $region35: #{basic_block_forward.5} parent=5 // pred_region
      %s179 = ssub.s32 %s10, 1
      %s180 = smul.u32 8, %s15
      %p181 = scmp.lt.s32.totalorder %s180, 63
      %s182 = scalar_select %p181, %s180, 63
      %s183 = smul.addr %s182, 4
      %s184 = scalar_lea.vmem %s0, %s183
      %p185 = pneg %p36
      %p186 = pneg %p33
      %p187 = pneg %p57
      %p188 = pneg %p54
      %p189 = pneg %p78
      %p190 = pneg %p75
      %s191 = smul.u32 8, %s15
      %p192 = scmp.lt.s32.totalorder %s191, 63
      %s193 = scalar_select %p192, %s191, 63
      %s194 = smul.addr %s193, 4
      %s195 = scalar_lea.vmem %s3, %s194
      %p196 = pneg %p104
      %p197 = pneg %p101
      %p198 = pneg %p130
      %p199 = pneg %p127
      %s200 = smul.u32 8, %s15
      %p201 = scmp.lt.s32.totalorder %s200, 63
      %s202 = scalar_select %p201, %s200, 63
      %s203 = smul.addr %s202, 4
      %s204 = scalar_lea.vmem %s4, %s203
      %s205 = smul.u32 8, %s15
      %p206 = scmp.lt.s32.totalorder %s205, 63
      %s207 = scalar_select %p206, %s205, 63
      %s208 = smul.addr %s207, 4
      %s209 = scalar_lea.vmem %s0, %s208
      %s210 = smul.u32 8, %s15
      %s211 = smul.u32 8, %s15
      %p212 = scmp.lt.s32.totalorder %s211, 63
      %s213 = scalar_select %p212, %s211, 63
      %s214 = smul.addr %s213, 4
      %s215 = scalar_lea.vmem %s3, %s214
      %s216 = smul.u32 8, %s15
      %s217 = smul.u32 8, %s15
      %p218 = scmp.lt.s32.totalorder %s217, 63
      %s219 = scalar_select %p218, %s217, 63
      %s220 = smul.addr %s219, 4
      %s221 = scalar_lea.vmem %s4, %s220
      %s222 = smul.u32 8, %s15
      %v223 = vld [vmem:[%s209] sm:$0xf]
      %v224 = vld [vmem:[%s209 + $0x4] sm:$0xf]
      %v225 = vld [vmem:[%s209 + $0x8] sm:$0xf]
      %v226 = vld [vmem:[%s209 + $0xc] sm:$0xf]
      %v227 = vld [vmem:[%s209 + $0x10] sm:$0xf]
      %v228 = vld [vmem:[%s209 + $0x14] sm:$0xf]
      %v229 = vld [vmem:[%s209 + $0x18] sm:$0xf]
      %v230 = vld [vmem:[%s209 + $0x1c] sm:$0xf]
      %v231 = vunpack.c.l.bf16 %v223
      %v232 = vunpack.c.l.bf16 %v224
      %v233 = vunpack.c.l.bf16 %v225
      %v234 = vunpack.c.l.bf16 %v226
      %v235 = vunpack.c.l.bf16 %v227
      %v236 = vunpack.c.l.bf16 %v228
      %v237 = vunpack.c.l.bf16 %v229
      %v238 = vunpack.c.l.bf16 %v230
      %v239 = vld [vmem:[%s1] sm:$0x1]
      %v241 = vlaneseq
      %v242 = vshrl.u32 %v241, 7
      %v243 = vsub.s32 0, %v242
      %v244 = vrot.slane %v239, %v243
      %v246 = vmul.f32 %v231, %v244
      %v247 = vmul.f32 %v232, %v244
      %v248 = vmul.f32 %v233, %v244
      %v249 = vmul.f32 %v234, %v244
      %v250 = vmul.f32 %v235, %v244
      %v251 = vmul.f32 %v236, %v244
      %v252 = vmul.f32 %v237, %v244
      %v253 = vmul.f32 %v238, %v244
      %v254 = vld [vmem:[%s2] sm:$0x1]
      %v256 = vlaneseq
      %v257 = vshrl.u32 %v256, 7
      %v258 = vsub.s32 0, %v257
      %v259 = vrot.slane %v254, %v258
      %v261 = vadd.f32 %v246, %v259
      %v262 = vadd.f32 %v247, %v259
      %v263 = vadd.f32 %v248, %v259
      %v264 = vadd.f32 %v249, %v259
      %v265 = vadd.f32 %v250, %v259
      %v266 = vadd.f32 %v251, %v259
      %v267 = vadd.f32 %v252, %v259
      %v268 = vadd.f32 %v253, %v259
      %v269 = vld [vmem:[%s215] sm:$0xf]
      %v270 = vld [vmem:[%s215 + $0x4] sm:$0xf]
      %v271 = vld [vmem:[%s215 + $0x8] sm:$0xf]
      %v272 = vld [vmem:[%s215 + $0xc] sm:$0xf]
      %v273 = vld [vmem:[%s215 + $0x10] sm:$0xf]
      %v274 = vld [vmem:[%s215 + $0x14] sm:$0xf]
      %v275 = vld [vmem:[%s215 + $0x18] sm:$0xf]
      %v276 = vld [vmem:[%s215 + $0x1c] sm:$0xf]
      %v277 = vunpack.c.l.bf16 %v269
      %v278 = vunpack.c.l.bf16 %v270
      %v279 = vunpack.c.l.bf16 %v271
      %v280 = vunpack.c.l.bf16 %v272
      %v281 = vunpack.c.l.bf16 %v273
      %v282 = vunpack.c.l.bf16 %v274
      %v283 = vunpack.c.l.bf16 %v275
      %v284 = vunpack.c.l.bf16 %v276
      %v285 = vadd.f32 %v261, %v277
      %v286 = vadd.f32 %v262, %v278
      %v287 = vadd.f32 %v263, %v279
      %v288 = vadd.f32 %v264, %v280
      %v289 = vadd.f32 %v265, %v281
      %v290 = vadd.f32 %v266, %v282
      %v291 = vadd.f32 %v267, %v283
      %v292 = vadd.f32 %v268, %v284
      %v293 = vmax.f32 %v285, 0.0
      %v294 = vmax.f32 %v286, 0.0
      %v295 = vmax.f32 %v287, 0.0
      %v296 = vmax.f32 %v288, 0.0
      %v297 = vmax.f32 %v289, 0.0
      %v298 = vmax.f32 %v290, 0.0
      %v299 = vmax.f32 %v291, 0.0
      %v300 = vmax.f32 %v292, 0.0
      %v301 = vpack.c.bf16 %v294, %v293
      %v302 = vpack.c.bf16 %v296, %v295
      %v303 = vpack.c.bf16 %v298, %v297
      %v304 = vpack.c.bf16 %v300, %v299
      %v309 = vunpack.c.l.b16 %v301
      %v310 = vunpack.c.h.b16 %v301
      %v311 = vunpack.c.l.b16 %v302
      %v312 = vunpack.c.h.b16 %v302
      %v313 = vunpack.c.l.b16 %v303
      %v314 = vunpack.c.h.b16 %v303
      %v315 = vunpack.c.l.b16 %v304
      %v316 = vunpack.c.h.b16 %v304
      %v317 = vpack.c.b16 %v309, %v309
      %v318 = vpack.c.b16 %v310, %v310
      %v319 = vpack.c.b16 %v311, %v311
      %v320 = vpack.c.b16 %v312, %v312
      %v321 = vpack.c.b16 %v313, %v313
      %v322 = vpack.c.b16 %v314, %v314
      %v323 = vpack.c.b16 %v315, %v315
      %v324 = vpack.c.b16 %v316, %v316
      %333 = vst [vmem:[%s221] sm:$0xf] %v317
      %334 = vst [vmem:[%s221 + $0x4] sm:$0xf] %v318
      %335 = vst [vmem:[%s221 + $0x8] sm:$0xf] %v319
      %336 = vst [vmem:[%s221 + $0xc] sm:$0xf] %v320
      %337 = vst [vmem:[%s221 + $0x10] sm:$0xf] %v321
      %338 = vst [vmem:[%s221 + $0x14] sm:$0xf] %v322
      %339 = vst [vmem:[%s221 + $0x18] sm:$0xf] %v323
      %340 = vst [vmem:[%s221 + $0x1c] sm:$0xf] %v324
      %s341 = smul.u32 8, %s15
      %p342 = scmp.lt.s32.totalorder %s341, 63
      %s343 = scalar_select %p342, %s341, 63
      %s344 = smul.addr %s343, 4
      %s345 = scalar_lea.vmem %s4, %s344
      // Predicated region
      $region37: #{basic_block_forward.5} parent=35 // pred_check
        %p346 = pneg %p127
      $region38: #{basic_block_forward.5} parent=35 // pred_check_branch
        %348 = sbr.rel (%p346) target = $region40
      $region39: #{basic_block_forward.5} parent=35 // pred_region
        %s349 = smul.u32 8, %s15
      $region40: #{basic_block_forward.5} parent=35 // pred_fallthru
        _
    $region36: #{basic_block_forward.5} parent=5 // pred_fallthru
      _
    %p350 = scmp.le.s32.totalorder 2, %s10
    // Predicated region
    $region41: #{basic_block_forward.5} parent=5 // pred_check
      %p351 = pneg %p350
    $region42: #{basic_block_forward.5} parent=5 // pred_check_branch
      %353 = sbr.rel (%p351) target = $region44
    $region43: #{basic_block_forward.5} parent=5 // pred_region
      %s354 = ssub.s32 %s10, 2
      // Predicated region
      $region45: #{basic_block_forward.5} parent=43 // pred_check
        %p355 = pneg %p133
      $region46: #{basic_block_forward.5} parent=43 // pred_check_branch
        %357 = sbr.rel (%p355) target = $region48
      $region47: #{basic_block_forward.5} parent=43 // pred_region
        %s358 = smul.u32 8, %s16
        %p359 = scmp.lt.s32.totalorder %s358, 63
        %s360 = scalar_select %p359, %s358, 63
        %s361 = smul.addr %s360, 4
        %s362 = scalar_lea.vmem %s4, %s361
      $region48: #{basic_block_forward.5} parent=43 // pred_fallthru
        _
    $region44: #{basic_block_forward.5} parent=5 // pred_fallthru
      _
  $region6: #{basic_block_forward.5} parent=0 // loop_footer
    %s14 = sadd.s32 1, %s10
  $region7: #{basic_block_forward.5} parent=0 // loop_footer_branch
    %9 = sbr.rel target = $region3
  $region8: #{basic_block_forward.5} parent=0 // loop_exit
    _

</llo_original>
